<compile_context>
chip_gen: v6e
topology: v6e:2x2x1
jax: 0.10.0
libtpu: 0.0.40
codegen_flags: <defaults>
</compile_context>

<pallas_src>
import functools

import jax
import jax.numpy as jnp
from jax.experimental import pallas as pl
from jax.experimental.pallas import tpu as pltpu


N_CLASSES = 6
SUBLANES = 8  # classes padded 6 -> 8 on the sublane axis

_PENALTY_RAW = [
    [20, 4, 0, 0, 0, 0],
    [4, 20, 4, 0, 0, 0],
    [0, 4, 20, 4, 0, 0],
    [0, 0, 4, 20, 4, 0],
    [0, 0, 0, 4, 20, 4],
    [0, 0, 0, 0, 4, 20],
]
_PENALTY_MAX = float(max(max(row) for row in _PENALTY_RAW))
_DIAG_W = _PENALTY_RAW[0][0] / _PENALTY_MAX  # 1.0
_OFF_W = _PENALTY_RAW[0][1] / _PENALTY_MAX   # 0.2

# The kernel exploits the banded structure of the penalty matrix; verify it once here.
for _i in range(N_CLASSES):
    for _j in range(N_CLASSES):
        _expect = _DIAG_W if _i == _j else (_OFF_W if abs(_i - _j) == 1 else 0.0)
        assert _PENALTY_RAW[_i][_j] / _PENALTY_MAX == _expect, "penalty matrix not banded"


def _round_up(x, m):
    return ((x + m - 1) // m) * m


def _make_ce_kernel(global_batch, b_pad, tb, n_classes, sublanes, diag_w, off_w):
    """Kernel with shapes and the banded penalty weights baked in as constants."""
    inv_b = 1.0 / float(global_batch)
    needs_lane_mask = b_pad != global_batch  # trace-time decision

    def kernel(logits_ref, target_ref, out_ref, acc_ref):
        step = pl.program_id(0)

        @pl.when(step == 0)
        def _():
            acc_ref[...] = jnp.zeros_like(acc_ref)

        logits = logits_ref[...].astype(jnp.float32)   # (8, tb), classes on sublanes
        target = target_ref[...]                        # (1, tb) int32

        class_idx = jax.lax.broadcasted_iota(jnp.int32, (sublanes, 1), 0)  # (8, 1)
        class_valid = class_idx < n_classes                                  # (8, 1) bool

        # Numerically stable log_softmax over the class (sublane) axis,
        # ignoring the two padded class rows.
        neg_big = jnp.float32(-1e30)
        logits_m = jnp.where(class_valid, logits, neg_big)
        m = jnp.max(logits_m, axis=0, keepdims=True)                # (1, tb)
        shifted = logits_m - m
        exps = jnp.where(class_valid, jnp.exp(shifted), jnp.float32(0.0))
        lse = jnp.log(jnp.sum(exps, axis=0, keepdims=True))         # (1, tb)
        log_probs = shifted - lse                                    # (8, tb)

        # Banded penalty weights: w[c, b] = 1.0*(c == t_b) + 0.2*(|c - t_b| == 1).
        d = class_idx - target                                       # (8, tb) int32
        w = jnp.where(
            d == 0,
            jnp.float32(diag_w),
            jnp.where(jnp.abs(d) == 1, jnp.float32(off_w), jnp.float32(0.0)),
        )
        valid = class_valid
        if needs_lane_mask:
            lane_idx = step * tb + jax.lax.broadcasted_iota(jnp.int32, (1, tb), 1)
            valid = valid & (lane_idx < global_batch)
        w = jnp.where(valid, w, jnp.float32(0.0))

        # Deferred reduction: plain VPU accumulate each step.
        acc_ref[...] = acc_ref[...] + w * log_probs

        @pl.when(step == pl.num_programs(0) - 1)
        def _():
            out_ref[0] = -jnp.sum(acc_ref[...]) * jnp.float32(inv_b)

    return kernel


@functools.partial(jax.jit, static_argnames=("block_cols",))
def customized_cross_entropy_loss(logits, target, *, block_cols=4096):
    B, C = logits.shape
    assert C == N_CLASSES, "kernel is specialized to the 6-class penalty matrix"

    # Batch tile on the lane axis: multiple of 128, at most block_cols.
    tb = min(_round_up(block_cols, 128), _round_up(B, 128))
    b_pad = _round_up(B, tb)
    grid = (b_pad // tb,)

    # Re-layout: classes -> sublanes (pad 6 -> 8), batch -> lanes (pad to b_pad).
    logits_t = jnp.transpose(logits).astype(jnp.float32)            # (C, B)
    logits_t = jnp.pad(logits_t, ((0, SUBLANES - C), (0, b_pad - B)))
    target_row = target.astype(jnp.int32).reshape(1, B)
    target_row = jnp.pad(target_row, ((0, 0), (0, b_pad - B)))

    kernel = _make_ce_kernel(B, b_pad, tb, C, SUBLANES, _DIAG_W, _OFF_W)

    out = pl.pallas_call(
        kernel,
        out_shape=jax.ShapeDtypeStruct((1,), jnp.float32),
        grid=grid,
        in_specs=[
            pl.BlockSpec((SUBLANES, tb), lambda i: (0, i)),  # logits.T tile, lane-dense
            pl.BlockSpec((1, tb), lambda i: (0, i)),         # target row tile
        ],
        out_specs=pl.BlockSpec(memory_space=pltpu.SMEM),      # scalar loss via SMEM
        scratch_shapes=[pltpu.VMEM((SUBLANES, tb), jnp.float32)],  # vector accumulator
        compiler_params=pltpu.CompilerParams(
            dimension_semantics=("arbitrary",),
        ),
    )(logits_t, target_row)
    return out[0]


def _penalty_matrix_jnp():
    return jnp.asarray(_PENALTY_RAW, dtype=jnp.float32) / jnp.float32(_PENALTY_MAX)


def _reference(logits, target):
    B = logits.shape[0]
    log_probs = jax.nn.log_softmax(logits.astype(jnp.float32), axis=-1)
    new_hot = _penalty_matrix_jnp()[target.astype(jnp.int32)]
    return -jnp.sum(new_hot * log_probs) / B


if __name__ == "__main__":
    batch = 8
    n_classes = N_CLASSES

    key = jax.random.PRNGKey(0)
    k_logits, k_target = jax.random.split(key)
    logits = jax.random.normal(k_logits, (batch, n_classes), dtype=jnp.float32)
    target = jax.random.randint(k_target, (batch,), 0, n_classes, dtype=jnp.int32)

    loss = customized_cross_entropy_loss(logits, target)
    loss = jax.block_until_ready(loss)

    ref = _reference(logits, target)
    assert jnp.allclose(loss, ref, rtol=1e-5, atol=1e-5), (loss, ref)

    print("KERNEL_OK")
</pallas_src>

<mosaic_0001>
module attributes {stable_mosaic.version = 11 : i64} {
  func.func @kernel(%arg0: i32, %arg1: memref<8x128xf32, #tpu.memory_space<vmem>>, %arg2: memref<1x128xi32, #tpu.memory_space<vmem>>, %arg3: memref<1xf32, #tpu.memory_space<smem>>, %arg4: memref<8x128xf32, #tpu.memory_space<vmem>>) attributes {dimension_semantics = [#tpu.dimension_semantics<arbitrary>], iteration_bounds = array<i64: 1>, scalar_prefetch = 0 : i64, scratch_operands = 1 : i64, tpu.core_type = #tpu.core_type<tc>, window_params = [{transform_indices = @transform_0, window_bounds = array<i64: 8, 128>}, {transform_indices = @transform_1, window_bounds = array<i64: 1, 128>}, {transform_indices = @transform_2, window_bounds = array<i64: 1>}]} {
    %c0_i32 = arith.constant 0 : i32
    %0 = arith.cmpi eq, %arg0, %c0_i32 : i32
    %1 = arith.extui %0 : i1 to i32
    %c0_i32_0 = arith.constant 0 : i32
    %2 = arith.cmpi ne, %1, %c0_i32_0 : i32
    scf.if %2 {
      %cst_18 = arith.constant 0.000000e+00 : f32
      %57 = vector.broadcast %cst_18 : f32 to vector<8x128xf32>
      %c0_19 = arith.constant 0 : index
      %c0_20 = arith.constant 0 : index
      %58 = vector.load %arg4[%c0_19, %c0_20] : memref<8x128xf32, #tpu.memory_space<vmem>>, vector<8x128xf32>
      tpu.vector_store %arg4[%c0_19, %c0_20], %57 {strides = array<i32>} : memref<8x128xf32, #tpu.memory_space<vmem>>, vector<8x128xf32>,
    } else {
    }
    %c0 = arith.constant 0 : index
    %c0_1 = arith.constant 0 : index
    %3 = vector.load %arg1[%c0, %c0_1] : memref<8x128xf32, #tpu.memory_space<vmem>>, vector<8x128xf32>
    %c0_2 = arith.constant 0 : index
    %c0_3 = arith.constant 0 : index
    %4 = vector.load %arg2[%c0_2, %c0_3] : memref<1x128xi32, #tpu.memory_space<vmem>>, vector<1x128xi32>
    %5 = tpu.iota {dimensions = array<i32: 0>} : vector<8x1xi32>
    %c6_i32 = arith.constant 6 : i32
    %6 = vector.broadcast %c6_i32 : i32 to vector<8x1xi32>
    %7 = arith.cmpi slt, %5, %6 : vector<8x1xi32>
    %cst = arith.constant -1.000000e+30 : f32
    %8 = vector.shape_cast %7 : vector<8x1xi1> to vector<8x1xi1>
    %9 = vector.broadcast %8 : vector<8x1xi1> to vector<8x128xi1>
    %10 = vector.broadcast %cst : f32 to vector<8x128xf32>
    %11 = arith.select %9, %3, %10 : vector<8x128xi1>, vector<8x128xf32>
    %cst_4 = arith.constant dense<0xFF800000> : vector<128xf32>
    %12 = vector.multi_reduction <maximumf>, %11, %cst_4 [0] : vector<8x128xf32> to vector<128xf32>
    %13 = vector.shape_cast %12 : vector<128xf32> to vector<1x128xf32>
    %14 = vector.broadcast %13 : vector<1x128xf32> to vector<8x128xf32>
    %15 = arith.subf %11, %14 : vector<8x128xf32>
    %16 = math.exp %15 : vector<8x128xf32>
    %cst_5 = arith.constant 0.000000e+00 : f32
    %17 = vector.shape_cast %7 : vector<8x1xi1> to vector<8x1xi1>
    %18 = vector.broadcast %17 : vector<8x1xi1> to vector<8x128xi1>
    %19 = vector.broadcast %cst_5 : f32 to vector<8x128xf32>
    %20 = arith.select %18, %16, %19 : vector<8x128xi1>, vector<8x128xf32>
    %cst_6 = arith.constant dense<0.000000e+00> : vector<128xf32>
    %21 = vector.multi_reduction <add>, %20, %cst_6 [0] : vector<8x128xf32> to vector<128xf32>
    %22 = vector.shape_cast %21 : vector<128xf32> to vector<1x128xf32>
    %23 = math.log %22 : vector<1x128xf32>
    %24 = vector.broadcast %23 : vector<1x128xf32> to vector<8x128xf32>
    %25 = arith.subf %15, %24 : vector<8x128xf32>
    %26 = vector.broadcast %5 : vector<8x1xi32> to vector<8x128xi32>
    %27 = vector.broadcast %4 : vector<1x128xi32> to vector<8x128xi32>
    %28 = arith.subi %26, %27 : vector<8x128xi32>
    %c0_i32_7 = arith.constant 0 : i32
    %29 = vector.broadcast %c0_i32_7 : i32 to vector<8x128xi32>
    %30 = arith.cmpi eq, %28, %29 : vector<8x128xi32>
    %31 = math.absi %28 : vector<8x128xi32>
    %c1_i32 = arith.constant 1 : i32
    %32 = vector.broadcast %c1_i32 : i32 to vector<8x128xi32>
    %33 = arith.cmpi eq, %31, %32 : vector<8x128xi32>
    %cst_8 = arith.constant 2.000000e-01 : f32
    %cst_9 = arith.constant 0.000000e+00 : f32
    %34 = vector.broadcast %cst_8 : f32 to vector<8x128xf32>
    %35 = vector.broadcast %cst_9 : f32 to vector<8x128xf32>
    %36 = arith.select %33, %34, %35 : vector<8x128xi1>, vector<8x128xf32>
    %cst_10 = arith.constant 1.000000e+00 : f32
    %37 = vector.broadcast %cst_10 : f32 to vector<8x128xf32>
    %38 = arith.select %30, %37, %36 : vector<8x128xi1>, vector<8x128xf32>
    %c128_i32 = arith.constant 128 : i32
    %39 = arith.muli %arg0, %c128_i32 : i32
    %40 = tpu.iota {dimensions = array<i32: 1>} : vector<1x128xi32>
    %41 = vector.broadcast %39 : i32 to vector<1x128xi32>
    %42 = arith.addi %41, %40 : vector<1x128xi32>
    %c8_i32 = arith.constant 8 : i32
    %43 = vector.broadcast %c8_i32 : i32 to vector<1x128xi32>
    %44 = arith.cmpi slt, %42, %43 : vector<1x128xi32>
    %45 = vector.broadcast %7 : vector<8x1xi1> to vector<8x128xi1>
    %46 = vector.broadcast %44 : vector<1x128xi1> to vector<8x128xi1>
    %47 = arith.andi %45, %46 : vector<8x128xi1>
    %cst_11 = arith.constant 0.000000e+00 : f32
    %48 = vector.broadcast %cst_11 : f32 to vector<8x128xf32>
    %49 = arith.select %47, %38, %48 : vector<8x128xi1>, vector<8x128xf32>
    %c0_12 = arith.constant 0 : index
    %c0_13 = arith.constant 0 : index
    %50 = vector.load %arg4[%c0_12, %c0_13] : memref<8x128xf32, #tpu.memory_space<vmem>>, vector<8x128xf32>
    %51 = arith.mulf %49, %25 : vector<8x128xf32>
    %52 = arith.addf %50, %51 : vector<8x128xf32>
    %c0_14 = arith.constant 0 : index
    %c0_15 = arith.constant 0 : index
    %53 = vector.load %arg4[%c0_14, %c0_15] : memref<8x128xf32, #tpu.memory_space<vmem>>, vector<8x128xf32>
    tpu.vector_store %arg4[%c0_14, %c0_15], %52 {strides = array<i32>} : memref<8x128xf32, #tpu.memory_space<vmem>>, vector<8x128xf32>,
    %c0_i32_16 = arith.constant 0 : i32
    %54 = arith.cmpi eq, %arg0, %c0_i32_16 : i32
    %55 = arith.extui %54 : i1 to i32
    %c0_i32_17 = arith.constant 0 : i32
    %56 = arith.cmpi ne, %55, %c0_i32_17 : i32
    scf.if %56 {
      %c0_18 = arith.constant 0 : index
      %c0_19 = arith.constant 0 : index
      %57 = vector.load %arg4[%c0_18, %c0_19] : memref<8x128xf32, #tpu.memory_space<vmem>>, vector<8x128xf32>
      %58 = vector.shape_cast %57 : vector<8x128xf32> to vector<1x8x128xf32>
      %cst_20 = arith.constant dense<0.000000e+00> : vector<1xf32>
      %59 = vector.multi_reduction <add>, %58, %cst_20 [1, 2] : vector<1x8x128xf32> to vector<1xf32>
      %60 = vector.shape_cast %59 : vector<1xf32> to vector<1x1x1xf32>
      %61 = vector.extract %60[0, 0, 0] : f32 from vector<1x1x1xf32>
      %cst_21 = arith.constant 0.000000e+00 : f32
      %62 = arith.subf %cst_21, %61 : f32
      %cst_22 = arith.constant 1.250000e-01 : f32
      %63 = arith.mulf %62, %cst_22 : f32
      %c0_23 = arith.constant 0 : index
      %64 = memref.load %arg3[%c0_23] : memref<1xf32, #tpu.memory_space<smem>>
      memref.store %63, %arg3[%c0_23] : memref<1xf32, #tpu.memory_space<smem>>
    } else {
    }
    return
  }
  func.func @transform_0(%arg0: i32) -> (i32, i32) {
    %c0_i32 = arith.constant 0 : i32
    %c0_i32_0 = arith.constant 0 : i32
    return %c0_i32, %arg0 : i32, i32
  }
  func.func @transform_1(%arg0: i32) -> (i32, i32) {
    %c0_i32 = arith.constant 0 : i32
    %c0_i32_0 = arith.constant 0 : i32
    return %c0_i32, %arg0 : i32, i32
  }
  func.func @transform_2(%arg0: i32) -> i32 {
    %c0_i32 = arith.constant 0 : i32
    %c0_i32_0 = arith.constant 0 : i32
    return %c0_i32 : i32
  }
}

</mosaic_0001>

<llo_original>
// kernel: customized_cross_entropy_loss.1
$region0: #{customized_cross_entropy_loss.1}
  #allocation0 [shape = 'u32[]', space=smem, size = 0x4, offset = 0x4, fixed_abs, tag = 'smem constant byte address 0x4 - core index']
  #allocation1 [shape = 'u32[144,128]{1,0:T(1,128)}', space=vmem, size = 0x12000, scoped, tag = 'internal scratch']
  #allocation2 [shape = 'f32[8,128]{1,0:T(8,128)}', space=vmem, size = 0x1000, scoped, tag = 'scratch operand']
  %s0 = inlined_call_operand.vmem [shape: f32[8,128], index: 0, kind: input, shape index: {}]
  %s1 = inlined_call_operand.vmem [shape: s32[1,128], index: 1, kind: input, shape index: {}]
  %s2 = inlined_call_operand.hbm [shape: f32[1], index: 2, kind: output, shape index: {}]
  %s3 = sld [smem:[#allocation0]]
  $region26: #{customized_cross_entropy_loss.1} parent=0
    _
  %s5 = ssub.s32 1, %s3
  %s6 = scalar_select 0, %s5, %s3
  $region1: #{customized_cross_entropy_loss.1} parent=0
    #allocation3 [shape = 'u8[512]{0}', space=smem, size = 0x200, scoped, tag = 'output window, operand 0, single buffered']
    #allocation4 [shape = 's32[1]{0}', space=sflag, size = 0x4, scoped, tag = 'scoped memory for customized_cross_entropy_loss.1']
    %7 = vsyncpa [#allocation4], 0
    // Predicated region
    $region2: #{customized_cross_entropy_loss.1} parent=1 // pred_check
      _
    $region3: #{customized_cross_entropy_loss.1} parent=1 // pred_check_branch
      %9 = sbr.rel (0) target = $region5
    $region4: #{customized_cross_entropy_loss.1} parent=1 // pred_region
      _
    $region5: #{customized_cross_entropy_loss.1} parent=1 // pred_fallthru
      _
    // Predicated region
    $region6: #{customized_cross_entropy_loss.1} parent=1 // pred_check
      _
    $region7: #{customized_cross_entropy_loss.1} parent=1 // pred_check_branch
      %11 = sbr.rel (0) target = $region9
    $region8: #{customized_cross_entropy_loss.1} parent=1 // pred_region
      _
    $region9: #{customized_cross_entropy_loss.1} parent=1 // pred_fallthru
      _
    %p12 = scmp.eq.s32.totalorder 0, 0
    // Predicated region
    $region10: #{customized_cross_entropy_loss.1} parent=1 // pred_check
      %p13 = pneg %p12
    $region11: #{customized_cross_entropy_loss.1} parent=1 // pred_check_branch
      %15 = sbr.rel (%p13) target = $region13
    $region12: #{customized_cross_entropy_loss.1} parent=1 // pred_region
      %16 = vst [vmem:[#allocation2] sm:$0xff] 0.0
    $region13: #{customized_cross_entropy_loss.1} parent=1 // pred_fallthru
      _
    %v17 = vld [vmem:[%s0] sm:$0xff]
    %v18 = vld [vmem:[%s1] sm:$0x1]
    %v19 = vlaneseq
    %v20 = vshrl.u32 %v19, 7
    %vm21 = vcmp.lt.s32.totalorder %v20, 6
    %v22 = vsel %vm21, 1, 0
    %vm23 = vcmp.eq.s32.totalorder %v22, 1
    %v24 = vsel %vm23, %v17, -1e+30
    %v25 = vrot.slane %v24, 4
    %v26 = vmax.f32 %v24, %v25
    %v27 = vrot.slane %v26, 2
    %v28 = vmax.f32 %v26, %v27
    %v29 = vrot.slane %v28, 1
    %v30 = vmax.f32 %v28, %v29
    %v31 = vsub.f32 %v24, %v30
    %v32 = vmul.f32 %v31, 1.442695
    %v33 = vpow.pop %v32
    %v34 = vsel %vm23, %v33, 0.0
    %v35 = vrot.slane %v34, 4
    %v36 = vadd.f32 %v34, %v35
    %v37 = vrot.slane %v36, 2
    %v38 = vadd.f32 %v36, %v37
    %v39 = vrot.slane %v38, 1
    %v40 = vadd.f32 %v38, %v39
    %v41 = vlog2.pop %v40
    %v42 = vmul.f32 %v41, 0.6931472
    %v43 = vsub.f32 %v31, %v42
    %v44 = vlaneseq
    %v45 = vshrl.u32 %v44, 7
    %v46 = vsub.s32 0, %v45
    %v47 = vrot.slane %v18, %v46
    %v48 = vsub.s32 %v20, %v47
    %vm49 = vcmp.eq.s32.totalorder %v48, 0
    %vm50 = vcmp.lt.s32.totalorder %v48, 0
    %v51 = vsub.s32 0, %v48
    %v52 = vsel %vm50, %v51, %v48
    %vm53 = vcmp.eq.s32.totalorder %v52, 1
    %v54 = vsel %vm53, 0.2, 0.0
    %v55 = vsel %vm49, 1.0, %v54
    %s56 = smul.u32 0, 128
    %v57 = vlaneseq
    %v58 = vand.u32 %v57, 127
    %v59 = vstv %s56
    %v60 = vadd.s32 %v59, %v58
    %vm61 = vcmp.lt.s32.totalorder %v60, 8
    %v62 = vsel %vm61, 1, 0
    %vm63 = vcmp.eq.s32.totalorder %v62, 1
    %vm64 = vmand %vm23, %vm63
    %v65 = vsel %vm64, %v55, 0.0
    %v66 = vld [vmem:[#allocation2] sm:$0xff]
    %v67 = vmul.f32 %v65, %v43
    %v68 = vadd.f32 %v66, %v67
    %69 = vst [vmem:[#allocation2] sm:$0xff] %v68
    // Predicated region
    $region14: #{customized_cross_entropy_loss.1} parent=1 // pred_check
      %p70 = pneg %p12
    $region15: #{customized_cross_entropy_loss.1} parent=1 // pred_check_branch
      %72 = sbr.rel (%p70) target = $region17
    $region16: #{customized_cross_entropy_loss.1} parent=1 // pred_region
      %v73 = vld [vmem:[#allocation2] sm:$0xff]
      %74 = vadd.xlane.f32.xlu0 %v73
      %v75 = vpop.xlane.xlu0 %74
      %v76 = vrot.slane %v75, 4
      %v77 = vadd.f32 %v75, %v76
      %v78 = vrot.slane %v77, 2
      %v79 = vadd.f32 %v77, %v78
      %v80 = vrot.slane %v79, 1
      %v81 = vadd.f32 %v79, %v80
      %s82 = vtos %v81
      %s83 = ssub.f32 0.0, %s82
      %s84 = smul.f32 %s83, 0.125
      %s85 = scalar_lea.smem [#allocation3], 0
      %86 = sst [smem:[%s85]] %s84
    $region17: #{customized_cross_entropy_loss.1} parent=1 // pred_fallthru
      _
    // Predicated region
    $region18: #{customized_cross_entropy_loss.1} parent=1 // pred_check
      _
    $region19: #{customized_cross_entropy_loss.1} parent=1 // pred_check_branch
      %88 = sbr.rel (0) target = $region21
    $region20: #{customized_cross_entropy_loss.1} parent=1 // pred_region
      %s90 = ssub.s32 16, 16
      %91 = vsyncadd [#allocation4], %s90
      %94 = dma.smem_to_hbm [#allocation3], 16, %s2, [#allocation4]
    $region21: #{customized_cross_entropy_loss.1} parent=1 // pred_fallthru
      _
    // Predicated region
    $region22: #{customized_cross_entropy_loss.1} parent=1 // pred_check
      _
    $region23: #{customized_cross_entropy_loss.1} parent=1 // pred_check_branch
      %96 = sbr.rel (0) target = $region25
    $region24: #{customized_cross_entropy_loss.1} parent=1 // pred_region
      %97 = dma.done [#allocation4], 16
    $region25: #{customized_cross_entropy_loss.1} parent=1 // pred_fallthru
      _
    %98 = sfence
    %99 = vsyncpa [#allocation4], 1

</llo_original>
